<compile_context>
chip_gen: v5e
topology: v5e:2x2
jax: 0.10.0
libtpu: 0.0.40
codegen_flags: <defaults>
</compile_context>

<pallas_src>
import functools
import math

import jax
import jax.numpy as jnp
from jax.experimental import pallas as pl
from jax.experimental.pallas import tpu as pltpu

_EPS = 1e-12           # torch.nn.functional.normalize default eps
_EPS_SQ = _EPS * _EPS


def _round_up(a, b):
    return (a + b - 1) // b * b


def _chebyshev(m1, c):
    # cos(m1 * theta) as a polynomial in c = cos(theta), m1 in 0..5
    polys = [
        lambda v: v ** 0,
        lambda v: v,
        lambda v: 2 * v ** 2 - 1,
        lambda v: 4 * v ** 3 - 3 * v,
        lambda v: 8 * v ** 4 - 8 * v ** 2 + 1,
        lambda v: 16 * v ** 5 - 20 * v ** 3 + 5 * v,
    ]
    assert 0 <= m1 <= 5
    return polys[m1](c)


# ----------------------------------------------------------------------------
# Kernels
# ----------------------------------------------------------------------------
def _angle_linear_margin_kernel(x_ref, wt_ref, sw_ref, label_ref, out_ref, *,
                                s, m1, m2, m3, w_norm, x_norm, mxu_dtype):
    """Margin branch: label given and (m1, m2, m3) != (1, 0, 0)."""
    j = pl.program_id(1)

    x = x_ref[...].astype(jnp.float32)                         # (tm, K)
    s_x = jnp.sum(x * x, axis=1, keepdims=True)                # (tm, 1)
    inv_x = jax.lax.rsqrt(jnp.maximum(s_x, _EPS_SQ))           # 1/max(||x||, eps)

    s_w = sw_ref[...].astype(jnp.float32)                      # (1, tn)
    inv_w = jax.lax.rsqrt(jnp.maximum(s_w, _EPS_SQ))           # 1/max(||w||, eps)

    # Raw matmul on the MXU (bf16 feed by default), normalize the small output.
    raw = jnp.dot(x.astype(mxu_dtype), wt_ref[...].astype(mxu_dtype),
                  preferred_element_type=jnp.float32)          # (tm, tn)
    cos_c = jnp.clip(raw * inv_x * inv_w, -0.99, 0.99)

    phi = _chebyshev(m1, cos_c)
    if m2 != 0.0:
        phi = (math.cos(m2) * phi
               - math.sin(m2) * jnp.sqrt(jnp.maximum(1.0 - phi * phi, 0.0)))
    if m3 != 0.0:
        phi = phi - m3
    phi = jnp.where(cos_c > 0, phi, cos_c)

    tm, tn = cos_c.shape
    col = jax.lax.broadcasted_iota(jnp.int32, (tm, tn), 1) + j * tn
    one_hot = (col == label_ref[...]).astype(jnp.float32)      # (tm, tn)
    out = cos_c + one_hot * (phi - cos_c)                      # folded blend

    if not x_norm:
        # PyTorch rescales by the norm of the RE-normalized x == ||x||/max(||x||,eps)
        out = out * (jnp.sqrt(s_x) * inv_x)
    if not w_norm:
        out = out * jnp.sqrt(s_w)                              # raw weight row norms

    out_ref[...] = (out * s).astype(out_ref.dtype)


def _angle_linear_plain_kernel(x_ref, wt_ref, sw_ref, out_ref, *,
                               s, w_norm, x_norm, mxu_dtype):
    """No-label (or zero-margin) branch: (possibly normalized) linear."""
    x = x_ref[...].astype(jnp.float32)
    out = jnp.dot(x.astype(mxu_dtype), wt_ref[...].astype(mxu_dtype),
                  preferred_element_type=jnp.float32)
    if x_norm:
        s_x = jnp.sum(x * x, axis=1, keepdims=True)
        out = out * jax.lax.rsqrt(jnp.maximum(s_x, _EPS_SQ))
    if w_norm:
        s_w = sw_ref[...].astype(jnp.float32)
        out = out * jax.lax.rsqrt(jnp.maximum(s_w, _EPS_SQ))
    out_ref[...] = (out * s).astype(out_ref.dtype)


# ----------------------------------------------------------------------------
# Wrapper
# ----------------------------------------------------------------------------
def angle_linear(x, weight, label=None, *, w_norm=True, x_norm=True,
                 s=1.0, m1=1, m2=0.5, m3=0.0,
                 mxu_dtype=jnp.bfloat16, block_b=None, block_o=None):
    """JAX/Pallas equivalent of AngleLinear.forward(x, label)."""
    x = jnp.asarray(x)
    weight = jnp.asarray(weight)
    B, K = x.shape
    O, Kw = weight.shape
    assert K == Kw
    out_dtype = x.dtype

    # --- tile selection: tm multiple of 8, tn multiple of 128 (lane-dense) ---
    if block_b is not None:
        tm = _round_up(max(int(block_b), 8), 8)
    else:
        tm = 256 if B >= 256 else _round_up(B, 8)
    if block_o is not None:
        tn = _round_up(max(int(block_o), 128), 128)
    else:
        tn = 512 if O >= 512 else _round_up(O, 128)
    K_pad = _round_up(K, 128)
    # TODO(synk): add a K grid axis + f32 accumulator scratch if F_in grows
    # beyond a few thousand (keeps per-tile VMEM bounded on v7x's 64 MiB).

    # Keep double-buffered block footprint under the smallest default
    # scoped-VMEM limit (v5e: 16 MiB). Shrink tn first, then tm.
    def footprint(tm_, tn_):
        return 2 * 4 * (tm_ * K_pad + K_pad * tn_ + tm_ * tn_ + tn_ + tm_)
    budget = 12 * 1024 * 1024
    while footprint(tm, tn) > budget and tn > 128:
        tn //= 2
    while footprint(tm, tn) > budget and tm > 8:
        tm //= 2

    B_pad = _round_up(B, tm)
    O_pad = _round_up(O, tn)
    grid = (B_pad // tm, O_pad // tn)

    # --- host-side prep (done once per call; weight transpose + per-class
    #     squared norms are parameter-side work, free at steady state) ---
    x_f = x.astype(jnp.float32)
    w_f = weight.astype(jnp.float32)
    x_p = jnp.pad(x_f, ((0, B_pad - B), (0, K_pad - K)))
    wt_p = jnp.pad(w_f.T, ((0, K_pad - K), (0, O_pad - O)))              # (K_pad, O_pad)
    sw_p = jnp.pad(jnp.sum(w_f * w_f, axis=1)[None, :], ((0, 0), (0, O_pad - O)))

    x_spec = pl.BlockSpec((tm, K_pad), lambda i, j: (i, 0))
    wt_spec = pl.BlockSpec((K_pad, tn), lambda i, j: (0, j))
    sw_spec = pl.BlockSpec((1, tn), lambda i, j: (0, j))
    out_spec = pl.BlockSpec((tm, tn), lambda i, j: (i, j))
    out_shape = jax.ShapeDtypeStruct((B_pad, O_pad), out_dtype)

    cost = pl.CostEstimate(
        flops=2 * B_pad * O_pad * K_pad,
        transcendentals=0,
        bytes_accessed=4 * (B_pad * K_pad + K_pad * O_pad + B_pad * O_pad
                            + O_pad + B_pad))
    cparams = pltpu.CompilerParams(dimension_semantics=("parallel", "parallel"))

    use_margin = (label is not None) and not (m1 == 1 and m2 == 0 and m3 == 0)

    if use_margin:
        lab = jnp.asarray(label).reshape(-1).astype(jnp.int32)
        lab_p = jnp.pad(lab, (0, B_pad - B), constant_values=-1)[:, None]  # (B_pad, 1)
        kernel = functools.partial(
            _angle_linear_margin_kernel, s=float(s), m1=int(m1), m2=float(m2),
            m3=float(m3), w_norm=bool(w_norm), x_norm=bool(x_norm),
            mxu_dtype=mxu_dtype)
        out_p = pl.pallas_call(
            kernel,
            out_shape=out_shape,
            grid_spec=pltpu.PrefetchScalarGridSpec(
                num_scalar_prefetch=0,
                grid=grid,
                in_specs=[x_spec, wt_spec, sw_spec,
                          pl.BlockSpec((tm, 1), lambda i, j: (i, 0))],
                out_specs=out_spec),
            compiler_params=cparams,
            cost_estimate=cost,
        )(x_p, wt_p, sw_p, lab_p)
    else:
        kernel = functools.partial(
            _angle_linear_plain_kernel, s=float(s),
            w_norm=bool(w_norm), x_norm=bool(x_norm), mxu_dtype=mxu_dtype)
        out_p = pl.pallas_call(
            kernel,
            out_shape=out_shape,
            grid_spec=pltpu.PrefetchScalarGridSpec(
                num_scalar_prefetch=0,
                grid=grid,
                in_specs=[x_spec, wt_spec, sw_spec],
                out_specs=out_spec),
            compiler_params=cparams,
            cost_estimate=cost,
        )(x_p, wt_p, sw_p)

    return out_p[:B, :O]


# ----------------------------------------------------------------------------
# Pure-JAX references
# ----------------------------------------------------------------------------
def _margin_epilogue(cosine, label, num_classes, m1, m2, m3):
    cc = jnp.clip(cosine, -0.99, 0.99)
    phi = _chebyshev(int(m1), cc)
    if m2 != 0:
        phi = (math.cos(m2) * phi
               - math.sin(m2) * jnp.sqrt(jnp.maximum(1.0 - phi * phi, 0.0)))
    if m3 != 0:
        phi = phi - m3
    phi = jnp.where(cc > 0, phi, cc)
    one_hot = jax.nn.one_hot(label, num_classes, dtype=jnp.float32)
    return one_hot * phi + (1.0 - one_hot) * cc


def _reference_torch(x, weight, label, *, s, m1, m2, m3, w_norm=True, x_norm=True):
    """Faithful mirror of the PyTorch forward, full f32 math."""
    x = x.astype(jnp.float32)
    w = weight.astype(jnp.float32)
    normalize = lambda a: a / jnp.maximum(
        jnp.linalg.norm(a, axis=1, keepdims=True), _EPS)
    xn = normalize(x) if x_norm else x
    wn = normalize(w) if w_norm else w
    hi = jax.lax.Precision.HIGHEST
    output = jnp.dot(xn, wn.T, precision=hi)
    if label is not None and not (m1 == 1 and m2 == 0 and m3 == 0):
        xc = xn if x_norm else normalize(x)
        wc = wn if w_norm else normalize(w)
        output = _margin_epilogue(jnp.dot(xc, wc.T, precision=hi),
                                  label, weight.shape[0], m1, m2, m3)
        if not x_norm:
            output = output * jnp.linalg.norm(xc, axis=1, keepdims=True)
        if not w_norm:
            output = output * jnp.sqrt(jnp.sum(w * w, axis=1))[None, :]
    return output * s


def _reference_kernel_math(x, weight, label, *, s, m1, m2, m3,
                           w_norm=True, x_norm=True, mxu_dtype=jnp.float32):
    """Mirror of the kernel's exact arithmetic (raw matmul at mxu_dtype,
    output-side rsqrt scaling) for tight checking of the bf16 fast path."""
    x = x.astype(jnp.float32)
    w = weight.astype(jnp.float32)
    s_x = jnp.sum(x * x, axis=1, keepdims=True)
    s_w = jnp.sum(w * w, axis=1)[None, :]
    inv_x = jax.lax.rsqrt(jnp.maximum(s_x, _EPS_SQ))
    inv_w = jax.lax.rsqrt(jnp.maximum(s_w, _EPS_SQ))
    raw = jnp.dot(x.astype(mxu_dtype), w.T.astype(mxu_dtype),
                  preferred_element_type=jnp.float32)
    if label is None or (m1 == 1 and m2 == 0 and m3 == 0):
        out = raw
        if x_norm:
            out = out * inv_x
        if w_norm:
            out = out * inv_w
        return out * s
    out = _margin_epilogue(raw * inv_x * inv_w, label, weight.shape[0], m1, m2, m3)
    if not x_norm:
        out = out * (jnp.sqrt(s_x) * inv_x)
    if not w_norm:
        out = out * jnp.sqrt(s_w)
    return out * s


if __name__ == "__main__":
    key = jax.random.PRNGKey(0)
    k_x, k_w, k_l = jax.random.split(key, 3)

    B, IN_F, OUT_F = 16, 64, 300
    S, M1, M2, M3 = 1.0, 1, 0.5, 0.0   # module defaults (ArcFace-style margin)

    x = jax.random.normal(k_x, (B, IN_F), dtype=jnp.float32)
    # deterministic xavier_uniform_-style init for weight (out_features, in_features)
    bound = math.sqrt(6.0 / (IN_F + OUT_F))
    weight = jax.random.uniform(k_w, (OUT_F, IN_F), dtype=jnp.float32,
                                minval=-bound, maxval=bound)
    label = jax.random.randint(k_l, (B,), 0, OUT_F, dtype=jnp.int32)

    # 1) f32 MXU path on a forced multi-tile grid (2x3) — exercises tiled
    #    index maps, one-hot column offsets and padding/slicing.
    out_f32 = angle_linear(x, weight, label, s=S, m1=M1, m2=M2, m3=M3,
                           mxu_dtype=jnp.float32, block_b=8, block_o=128)
    out_plain_f32 = angle_linear(x, weight, None, s=S, m1=M1, m2=M2, m3=M3,
                                 mxu_dtype=jnp.float32, block_b=8, block_o=128)
    # 2) performance default: bf16 MXU feed, auto tile selection.
    out_bf16 = angle_linear(x, weight, label, s=S, m1=M1, m2=M2, m3=M3)
    out_plain_bf16 = angle_linear(x, weight, None, s=S, m1=M1, m2=M2, m3=M3)
    jax.block_until_ready((out_f32, out_plain_f32, out_bf16, out_plain_bf16))

    ref_f32 = _reference_torch(x, weight, label, s=S, m1=M1, m2=M2, m3=M3)
    ref_plain_f32 = _reference_torch(x, weight, None, s=S, m1=M1, m2=M2, m3=M3)
    ref_bf16 = _reference_kernel_math(x, weight, label, s=S, m1=M1, m2=M2, m3=M3,
                                      mxu_dtype=jnp.bfloat16)
    ref_plain_bf16 = _reference_kernel_math(x, weight, None, s=S, m1=M1, m2=M2,
                                            m3=M3, mxu_dtype=jnp.bfloat16)

    assert out_f32.shape == (B, OUT_F)
    assert out_bf16.shape == (B, OUT_F)
    # Semantics check vs. the PyTorch-faithful f32 reference (tolerance covers
    # the TPU matmul-precision differences between Pallas and XLA).
    assert jnp.allclose(out_f32, ref_f32, atol=1e-2, rtol=1e-2)
    assert jnp.allclose(out_plain_f32, ref_plain_f32, atol=1e-2, rtol=1e-2)
    # bf16 fast path checked tightly against a reference with identical math.
    assert jnp.allclose(out_bf16, ref_bf16, atol=2e-3, rtol=2e-3)
    assert jnp.allclose(out_plain_bf16, ref_plain_bf16, atol=2e-3, rtol=2e-3)

    print("KERNEL_OK")
</pallas_src>

<mosaic_0001>
module attributes {stable_mosaic.version = 11 : i64} {
  func.func @_angle_linear_margin_kernel(%arg0: i32, %arg1: i32, %arg2: memref<8x128xf32, #tpu.memory_space<vmem>>, %arg3: memref<128x128xf32, #tpu.memory_space<vmem>>, %arg4: memref<1x128xf32, #tpu.memory_space<vmem>>, %arg5: memref<8x1xi32, #tpu.memory_space<vmem>>, %arg6: memref<8x128xf32, #tpu.memory_space<vmem>>) attributes {dimension_semantics = [#tpu.dimension_semantics<parallel>, #tpu.dimension_semantics<parallel>], iteration_bounds = array<i64: 2, 3>, scalar_prefetch = 0 : i64, scratch_operands = 0 : i64, tpu.core_type = #tpu.core_type<tc>, window_params = [{transform_indices = @transform_0, window_bounds = array<i64: 8, 128>}, {transform_indices = @transform_1, window_bounds = array<i64: 128, 128>}, {transform_indices = @transform_2, window_bounds = array<i64: 1, 128>}, {transform_indices = @transform_3, window_bounds = array<i64: 8, 1>}, {transform_indices = @transform_4, window_bounds = array<i64: 8, 128>}]} {
    %c0 = arith.constant 0 : index
    %c0_0 = arith.constant 0 : index
    %0 = vector.load %arg2[%c0, %c0_0] : memref<8x128xf32, #tpu.memory_space<vmem>>, vector<8x128xf32>
    %1 = arith.mulf %0, %0 : vector<8x128xf32>
    %cst = arith.constant dense<0.000000e+00> : vector<8xf32>
    %2 = vector.multi_reduction <add>, %1, %cst [1] : vector<8x128xf32> to vector<8xf32>
    %3 = vector.shape_cast %2 : vector<8xf32> to vector<8x1xf32>
    %cst_1 = arith.constant 1.000000e-24 : f32
    %4 = vector.broadcast %cst_1 : f32 to vector<8x1xf32>
    %5 = arith.maximumf %3, %4 : vector<8x1xf32>
    %6 = math.rsqrt %5 : vector<8x1xf32>
    %c0_2 = arith.constant 0 : index
    %c0_3 = arith.constant 0 : index
    %7 = vector.load %arg4[%c0_2, %c0_3] : memref<1x128xf32, #tpu.memory_space<vmem>>, vector<1x128xf32>
    %cst_4 = arith.constant 1.000000e-24 : f32
    %8 = vector.broadcast %cst_4 : f32 to vector<1x128xf32>
    %9 = arith.maximumf %7, %8 : vector<1x128xf32>
    %10 = math.rsqrt %9 : vector<1x128xf32>
    %c0_5 = arith.constant 0 : index
    %c0_6 = arith.constant 0 : index
    %11 = vector.load %arg3[%c0_5, %c0_6] : memref<128x128xf32, #tpu.memory_space<vmem>>, vector<128x128xf32>
    %cst_7 = arith.constant dense<0.000000e+00> : vector<8x128xf32>
    %12 = tpu.matmul %0, %11, %cst_7 {dimension_numbers = #tpu.dot_dimension_numbers<[1], [0], [0], [1], [0, 0, 1, 1], [], []>} : vector<8x128xf32>, vector<128x128xf32>, vector<8x128xf32> -> vector<8x128xf32>
    %13 = vector.broadcast %6 : vector<8x1xf32> to vector<8x128xf32>
    %14 = arith.mulf %12, %13 : vector<8x128xf32>
    %15 = vector.broadcast %10 : vector<1x128xf32> to vector<8x128xf32>
    %16 = arith.mulf %14, %15 : vector<8x128xf32>
    %cst_8 = arith.constant -9.900000e-01 : f32
    %cst_9 = arith.constant 9.900000e-01 : f32
    %17 = vector.broadcast %cst_8 : f32 to vector<8x128xf32>
    %18 = arith.maximumf %17, %16 : vector<8x128xf32>
    %19 = vector.broadcast %cst_9 : f32 to vector<8x128xf32>
    %20 = arith.minimumf %19, %18 : vector<8x128xf32>
    %cst_10 = arith.constant 0.87758255 : f32
    %21 = vector.broadcast %cst_10 : f32 to vector<8x128xf32>
    %22 = arith.mulf %21, %20 : vector<8x128xf32>
    %23 = arith.mulf %20, %20 : vector<8x128xf32>
    %cst_11 = arith.constant 1.000000e+00 : f32
    %24 = vector.broadcast %cst_11 : f32 to vector<8x128xf32>
    %25 = arith.subf %24, %23 : vector<8x128xf32>
    %cst_12 = arith.constant 0.000000e+00 : f32
    %26 = vector.broadcast %cst_12 : f32 to vector<8x128xf32>
    %27 = arith.maximumf %25, %26 : vector<8x128xf32>
    %28 = math.sqrt %27 : vector<8x128xf32>
    %cst_13 = arith.constant 0.47942555 : f32
    %29 = vector.broadcast %cst_13 : f32 to vector<8x128xf32>
    %30 = arith.mulf %29, %28 : vector<8x128xf32>
    %31 = arith.subf %22, %30 : vector<8x128xf32>
    %cst_14 = arith.constant 0.000000e+00 : f32
    %32 = vector.broadcast %cst_14 : f32 to vector<8x128xf32>
    %33 = arith.cmpf ogt, %20, %32 : vector<8x128xf32>
    %34 = arith.select %33, %31, %20 : vector<8x128xi1>, vector<8x128xf32>
    %35 = tpu.iota {dimensions = array<i32: 1>} : vector<8x128xi32>
    %c128_i32 = arith.constant 128 : i32
    %36 = arith.muli %arg1, %c128_i32 : i32
    %37 = vector.broadcast %36 : i32 to vector<8x128xi32>
    %38 = arith.addi %35, %37 : vector<8x128xi32>
    %c0_15 = arith.constant 0 : index
    %c0_16 = arith.constant 0 : index
    %39 = vector.load %arg5[%c0_15, %c0_16] : memref<8x1xi32, #tpu.memory_space<vmem>>, vector<8x1xi32>
    %40 = vector.broadcast %39 : vector<8x1xi32> to vector<8x128xi32>
    %41 = arith.cmpi eq, %38, %40 : vector<8x128xi32>
    %42 = arith.extui %41 : vector<8x128xi1> to vector<8x128xi32>
    %43 = arith.sitofp %42 : vector<8x128xi32> to vector<8x128xf32>
    %44 = arith.subf %34, %20 : vector<8x128xf32>
    %45 = arith.mulf %43, %44 : vector<8x128xf32>
    %46 = arith.addf %20, %45 : vector<8x128xf32>
    %cst_17 = arith.constant 1.000000e+00 : f32
    %47 = vector.broadcast %cst_17 : f32 to vector<8x128xf32>
    %48 = arith.mulf %46, %47 : vector<8x128xf32>
    %c0_18 = arith.constant 0 : index
    %c0_19 = arith.constant 0 : index
    %49 = vector.load %arg6[%c0_18, %c0_19] : memref<8x128xf32, #tpu.memory_space<vmem>>, vector<8x128xf32>
    tpu.vector_store %arg6[%c0_18, %c0_19], %48 {strides = array<i32>} : memref<8x128xf32, #tpu.memory_space<vmem>>, vector<8x128xf32>,
    return
  }
  func.func @transform_0(%arg0: i32, %arg1: i32) -> (i32, i32) {
    %c0_i32 = arith.constant 0 : i32
    %c0_i32_0 = arith.constant 0 : i32
    return %arg0, %c0_i32 : i32, i32
  }
  func.func @transform_1(%arg0: i32, %arg1: i32) -> (i32, i32) {
    %c0_i32 = arith.constant 0 : i32
    %c0_i32_0 = arith.constant 0 : i32
    return %c0_i32, %arg1 : i32, i32
  }
  func.func @transform_2(%arg0: i32, %arg1: i32) -> (i32, i32) {
    %c0_i32 = arith.constant 0 : i32
    %c0_i32_0 = arith.constant 0 : i32
    return %c0_i32, %arg1 : i32, i32
  }
  func.func @transform_3(%arg0: i32, %arg1: i32) -> (i32, i32) {
    %c0_i32 = arith.constant 0 : i32
    %c0_i32_0 = arith.constant 0 : i32
    return %arg0, %c0_i32 : i32, i32
  }
  func.func @transform_4(%arg0: i32, %arg1: i32) -> (i32, i32) {
    %c0_i32 = arith.constant 0 : i32
    return %arg0, %arg1 : i32, i32
  }
}

</mosaic_0001>

<llo_original>
// kernel: tpu_custom_call.1
$region0: #{tpu_custom_call.1}
  #allocation0 [shape = 'u32[]', space=smem, size = 0x4, offset = 0x4, fixed_abs, tag = 'smem constant byte address 0x4 - core index']
  #allocation1 [shape = 'u32[72,128]{1,0:T(1,128)}', space=vmem, size = 0x9000, scoped, tag = 'internal scratch']
  %s0 = inlined_call_operand.vmem [shape: f32[16,128], index: 0, kind: input, shape index: {}]
  %s1 = inlined_call_operand.hbm [shape: f32[128,384], index: 1, kind: input, shape index: {}]
  %s2 = inlined_call_operand.hbm [shape: f32[1,384], index: 2, kind: input, shape index: {}]
  %s3 = inlined_call_operand.vmem [shape: s32[16,1], index: 3, kind: input, shape index: {}]
  %s4 = inlined_call_operand.hbm [shape: f32[16,384], index: 4, kind: output, shape index: {}]
  %s5 = sld [smem:[#allocation0]]
  $region57: #{tpu_custom_call.1} parent=0
    _
  %s7 = ssub.s32 1, %s5
  %s8 = scalar_select 0, %s7, %s5
  $region1: #{tpu_custom_call.1} parent=0
    #allocation2 [shape = 'u8[131072]{0}', space=vmem, size = 0x20000, scoped, tag = 'input window, operand 1']
    #allocation3 [shape = 's32[2]{0}', space=sflag, size = 0x8, scoped, tag = 'scoped memory for tpu_custom_call.1']
    #allocation4 [shape = 's32[2]{0}', space=sflag, size = 0x8, scoped, tag = 'scoped memory for tpu_custom_call.1']
    #allocation5 [shape = 'u8[1024]{0}', space=vmem, size = 0x400, scoped, tag = 'input window, operand 2']
    #allocation6 [shape = 's32[2]{0}', space=sflag, size = 0x8, scoped, tag = 'scoped memory for tpu_custom_call.1']
    #allocation7 [shape = 'u8[8192]{0}', space=vmem, size = 0x2000, scoped, tag = 'output window, operand 0']
    %9 = vsyncpa [#allocation3], 0
    %s10 = scalar_lea.sflag [#allocation3], 1
    %11 = vsyncpa %s10, 0
    %12 = vsyncpa [#allocation6], 0
    %s13 = scalar_lea.sflag [#allocation6], 1
    %14 = vsyncpa %s13, 0
    %15 = vsyncpa [#allocation4], 0
    %s16 = scalar_lea.sflag [#allocation4], 1
    %17 = vsyncpa %s16, 0
    loop: start=0, step=1, limit=8
    $region2: #{tpu_custom_call.1} parent=1 // loop_pre_header
      _
    $region3: #{tpu_custom_call.1} parent=1 // loop_header
      %s19 = sphi 0, %s23
      %p20 = scmp.ge.s32.totalorder %s19, 8
      %s26 = sphi 0, %s38
      %s27 = sphi 0, %s34
      %s28 = sphi 0, %s26
      %s29 = sphi 0, %s27
      %s30 = sphi 0, %s28
      %s31 = sphi 0, %s29
      %s41 = sphi 0, %s43
      %s44 = sphi 0, %s41
      %s45 = sphi 0, %s44
      %s61 = sphi 0, %s45
      %s67 = sphi 0, %s69
      %s70 = sphi 0, %s67
      %s71 = sphi 0, %s70
      %s87 = sphi 0, %s71
      %s93 = sphi 0, %s95
      %s96 = sphi 0, %s93
      %s97 = sphi 0, %s96
      %s113 = sphi 0, %s97
      %s119 = sphi 0, %s121
      %s122 = sphi 0, %s119
      %s123 = sphi 0, %s122
      %s139 = sphi 0, %s123
      %s147 = sphi 0, %s149
      %s150 = sphi 0, %s147
      %s151 = sphi 0, %s150
      %s167 = sphi 0, %s151
    $region4: #{tpu_custom_call.1} parent=1 // loop_header_branch
      %22 = sbr.rel (%p20) target = $region8
    $region5: #{tpu_custom_call.1} parent=1 // loop_body
      %s24 = ssub.s32 %s19, 1
      %s25 = ssub.s32 %s19, 2
      %s32 = sadd.s32 1, %s27
      %p33 = scmp.ge.s32.totalorder %s32, 3
      %s34 = scalar_select %p33, 0, %s32
      %s35 = sadd.s32 1, %s26
      %s36 = scalar_select %p33, %s35, %s26
      %p37 = scmp.ge.s32.totalorder %s36, 2
      %s38 = scalar_select %p37, 0, %s36
      %s39 = ssub.s32 %s26, %s38
      %p40 = scmp.eq.s32.totalorder %s39, 0
      %s42 = sadd.s32 %s41, 1
      %s43 = scalar_select %p40, %s41, %s42
      %p46 = pneg %p40
      %p47 = scmp.eq.s32.totalorder %s19, 5
      %p48 = por %p46, %p47
      %p49 = scmp.ne.s32.totalorder %s41, %s44
      %p50 = scmp.eq.s32.totalorder %s19, 0
      %p51 = por %p49, %p50
      %p52 = scmp.ne.s32.totalorder %s41, %s44
      %p53 = scmp.eq.s32.totalorder %s24, 5
      %p54 = por %p52, %p53
      %p55 = scmp.ne.s32.totalorder %s44, %s45
      %p56 = scmp.eq.s32.totalorder %s24, 0
      %p57 = por %p55, %p56
      %p58 = scmp.ne.s32.totalorder %s44, %s45
      %p59 = scmp.eq.s32.totalorder %s25, 5
      %p60 = por %p58, %p59
      %p62 = scmp.ne.s32.totalorder %s45, %s61
      %p63 = scmp.eq.s32.totalorder %s25, 0
      %p64 = por %p62, %p63
      %s65 = ssub.s32 %s27, %s34
      %p66 = scmp.eq.s32.totalorder %s65, 0
      %s68 = sadd.s32 %s67, 1
      %s69 = scalar_select %p66, %s67, %s68
      %p72 = pneg %p66
      %p73 = scmp.eq.s32.totalorder %s19, 5
      %p74 = por %p72, %p73
      %p75 = scmp.ne.s32.totalorder %s67, %s70
      %p76 = scmp.eq.s32.totalorder %s19, 0
      %p77 = por %p75, %p76
      %p78 = scmp.ne.s32.totalorder %s67, %s70
      %p79 = scmp.eq.s32.totalorder %s24, 5
      %p80 = por %p78, %p79
      %p81 = scmp.ne.s32.totalorder %s70, %s71
      %p82 = scmp.eq.s32.totalorder %s24, 0
      %p83 = por %p81, %p82
      %p84 = scmp.ne.s32.totalorder %s70, %s71
      %p85 = scmp.eq.s32.totalorder %s25, 5
      %p86 = por %p84, %p85
      %p88 = scmp.ne.s32.totalorder %s71, %s87
      %p89 = scmp.eq.s32.totalorder %s25, 0
      %p90 = por %p88, %p89
      %s91 = ssub.s32 %s27, %s34
      %p92 = scmp.eq.s32.totalorder %s91, 0
      %s94 = sadd.s32 %s93, 1
      %s95 = scalar_select %p92, %s93, %s94
      %p98 = pneg %p92
      %p99 = scmp.eq.s32.totalorder %s19, 5
      %p100 = por %p98, %p99
      %p101 = scmp.ne.s32.totalorder %s93, %s96
      %p102 = scmp.eq.s32.totalorder %s19, 0
      %p103 = por %p101, %p102
      %p104 = scmp.ne.s32.totalorder %s93, %s96
      %p105 = scmp.eq.s32.totalorder %s24, 5
      %p106 = por %p104, %p105
      %p107 = scmp.ne.s32.totalorder %s96, %s97
      %p108 = scmp.eq.s32.totalorder %s24, 0
      %p109 = por %p107, %p108
      %p110 = scmp.ne.s32.totalorder %s96, %s97
      %p111 = scmp.eq.s32.totalorder %s25, 5
      %p112 = por %p110, %p111
      %p114 = scmp.ne.s32.totalorder %s97, %s113
      %p115 = scmp.eq.s32.totalorder %s25, 0
      %p116 = por %p114, %p115
      %s117 = ssub.s32 %s26, %s38
      %p118 = scmp.eq.s32.totalorder %s117, 0
      %s120 = sadd.s32 %s119, 1
      %s121 = scalar_select %p118, %s119, %s120
      %p124 = pneg %p118
      %p125 = scmp.eq.s32.totalorder %s19, 5
      %p126 = por %p124, %p125
      %p127 = scmp.ne.s32.totalorder %s119, %s122
      %p128 = scmp.eq.s32.totalorder %s19, 0
      %p129 = por %p127, %p128
      %p130 = scmp.ne.s32.totalorder %s119, %s122
      %p131 = scmp.eq.s32.totalorder %s24, 5
      %p132 = por %p130, %p131
      %p133 = scmp.ne.s32.totalorder %s122, %s123
      %p134 = scmp.eq.s32.totalorder %s24, 0
      %p135 = por %p133, %p134
      %p136 = scmp.ne.s32.totalorder %s122, %s123
      %p137 = scmp.eq.s32.totalorder %s25, 5
      %p138 = por %p136, %p137
      %p140 = scmp.ne.s32.totalorder %s123, %s139
      %p141 = scmp.eq.s32.totalorder %s25, 0
      %p142 = por %p140, %p141
      %s143 = ssub.s32 %s26, %s38
      %s144 = ssub.s32 %s27, %s34
      %s145 = sor.u32 %s143, %s144
      %p146 = scmp.eq.s32.totalorder %s145, 0
      %s148 = sadd.s32 %s147, 1
      %s149 = scalar_select %p146, %s147, %s148
      %p152 = pneg %p146
      %p153 = scmp.eq.s32.totalorder %s19, 5
      %p154 = por %p152, %p153
      %p155 = scmp.ne.s32.totalorder %s147, %s150
      %p156 = scmp.eq.s32.totalorder %s19, 0
      %p157 = por %p155, %p156
      %p158 = scmp.ne.s32.totalorder %s147, %s150
      %p159 = scmp.eq.s32.totalorder %s24, 5
      %p160 = por %p158, %p159
      %p161 = scmp.ne.s32.totalorder %s150, %s151
      %p162 = scmp.eq.s32.totalorder %s24, 0
      %p163 = por %p161, %p162
      %p164 = scmp.ne.s32.totalorder %s150, %s151
      %p165 = scmp.eq.s32.totalorder %s25, 5
      %p166 = por %p164, %p165
      %p168 = scmp.ne.s32.totalorder %s151, %s167
      %p169 = scmp.eq.s32.totalorder %s25, 0
      %p170 = por %p168, %p169
      %p171 = scmp.le.s32.totalorder 1, %s19
      %p172 = scmp.lt.s32.totalorder %s19, 7
      %p173 = pnand %p171, %p172
      %p174 = pneg %p173
      // Predicated region
      $region9: #{tpu_custom_call.1} parent=5 // pred_check
        _
      $region10: #{tpu_custom_call.1} parent=5 // pred_check_branch
        %176 = sbr.rel (%p173) target = $region12
      $region11: #{tpu_custom_call.1} parent=5 // pred_region
        %s177 = ssub.s32 %s19, 1
      $region12: #{tpu_custom_call.1} parent=5 // pred_fallthru
        _
      %p178 = scmp.lt.s32.totalorder %s19, 6
      // Predicated region
      $region13: #{tpu_custom_call.1} parent=5 // pred_check
        %p179 = pneg %p178
      $region14: #{tpu_custom_call.1} parent=5 // pred_check_branch
        %181 = sbr.rel (%p179) target = $region16
      $region15: #{tpu_custom_call.1} parent=5 // pred_region
        // Predicated region
        $region17: #{tpu_custom_call.1} parent=15 // pred_check
          %p182 = pneg %p51
        $region18: #{tpu_custom_call.1} parent=15 // pred_check_branch
          %184 = sbr.rel (%p182) target = $region20
        $region19: #{tpu_custom_call.1} parent=15 // pred_region
          %p185 = scmp.lt.s32.totalorder %s26, 1
          %s186 = scalar_select %p185, %s26, 1
          %s187 = smul.addr %s186, 8
          %s188 = scalar_lea.vmem %s0, %s187
        $region20: #{tpu_custom_call.1} parent=15 // pred_fallthru
          _
        // Predicated region
        $region21: #{tpu_custom_call.1} parent=15 // pred_check
          %p189 = pneg %p77
        $region22: #{tpu_custom_call.1} parent=15 // pred_check_branch
          %191 = sbr.rel (%p189) target = $region24
        $region23: #{tpu_custom_call.1} parent=15 // pred_region
          %s192 = sand.u32 %s67, 1
          %s193 = scalar_lea.sflag [#allocation3], %s192
          %s194 = sand.u32 %s67, 1
          %s195 = smul.addr %s194, 128
          %s196 = scalar_lea.vmem [#allocation2], %s195
          %198 = vsyncadd %s193, 0
          %s199 = smul.addr %s27, 8
          %s200 = scalar_lea.hbm %s1, %s199
          %s201 = sshll.u32 %s200, 4
          %s202 = int_to_ptr.hbm [resolvable:$true] %s201
          %s203 = sshll.u32 %s196, 4
          %s204 = int_to_ptr.vmem [resolvable:$true] %s203
          %209 = dma.hbm_to_vmem [thread:$0]  %s202, 2048, %s204, %s193, 384, 128, 8
        $region24: #{tpu_custom_call.1} parent=15 // pred_fallthru
          _
        // Predicated region
        $region25: #{tpu_custom_call.1} parent=15 // pred_check
          %p210 = pneg %p103
        $region26: #{tpu_custom_call.1} parent=15 // pred_check_branch
          %212 = sbr.rel (%p210) target = $region28
        $region27: #{tpu_custom_call.1} parent=15 // pred_region
          %s213 = sand.u32 %s93, 1
          %s214 = scalar_lea.sflag [#allocation6], %s213
          %s215 = sand.u32 %s93, 1
          %s216 = scalar_lea.vmem [#allocation5], %s215
          %218 = vsyncadd %s214, 0
          %s219 = scalar_lea.hbm %s2, %s27
          %s221 = sshll.u32 %s219, 4
          %s222 = int_to_ptr.hbm [resolvable:$true] %s221
          %s223 = sshll.u32 %s216, 4
          %s224 = int_to_ptr.vmem [resolvable:$true] %s223
          %226 = dma.hbm_to_vmem [thread:$0]  %s222, 16, %s224, %s214
        $region28: #{tpu_custom_call.1} parent=15 // pred_fallthru
          _
        // Predicated region
        $region29: #{tpu_custom_call.1} parent=15 // pred_check
          %p227 = pneg %p129
        $region30: #{tpu_custom_call.1} parent=15 // pred_check_branch
          %229 = sbr.rel (%p227) target = $region32
        $region31: #{tpu_custom_call.1} parent=15 // pred_region
          %p230 = scmp.lt.s32.totalorder %s26, 1
          %s231 = scalar_select %p230, %s26, 1
          %s232 = smul.addr %s231, 8
          %s233 = scalar_lea.vmem %s3, %s232
        $region32: #{tpu_custom_call.1} parent=15 // pred_fallthru
          _
      $region16: #{tpu_custom_call.1} parent=5 // pred_fallthru
        _
      %p234 = scmp.le.s32.totalorder 1, %s19
      %p235 = scmp.lt.s32.totalorder %s19, 7
      %p236 = pnand %p234, %p235
      %p237 = pneg %p236
      // Predicated region
      $region33: #{tpu_custom_call.1} parent=5 // pred_check
        _
      $region34: #{tpu_custom_call.1} parent=5 // pred_check_branch
        %239 = sbr.rel (%p236) target = $region36
      $region35: #{tpu_custom_call.1} parent=5 // pred_region
        %s240 = ssub.s32 %s19, 1
        %s241 = sand.u32 %s70, 1
        %s242 = scalar_lea.sflag [#allocation3], %s241
        %s243 = sand.u32 %s70, 1
        %s244 = smul.addr %s243, 128
        %s245 = scalar_lea.vmem [#allocation2], %s244
        // Predicated region
        $region37: #{tpu_custom_call.1} parent=35 // pred_check
          %p246 = pneg %p83
        $region38: #{tpu_custom_call.1} parent=35 // pred_check_branch
          %248 = sbr.rel (%p246) target = $region40
        $region39: #{tpu_custom_call.1} parent=35 // pred_region
          %250 = dma.done %s242, 2048
        $region40: #{tpu_custom_call.1} parent=35 // pred_fallthru
          _
        %s251 = sand.u32 %s96, 1
        %s252 = scalar_lea.sflag [#allocation6], %s251
        %s253 = sand.u32 %s96, 1
        %s254 = scalar_lea.vmem [#allocation5], %s253
        // Predicated region
        $region41: #{tpu_custom_call.1} parent=35 // pred_check
          %p255 = pneg %p109
        $region42: #{tpu_custom_call.1} parent=35 // pred_check_branch
          %257 = sbr.rel (%p255) target = $region44
        $region43: #{tpu_custom_call.1} parent=35 // pred_region
          %259 = dma.done %s252, 16
        $region44: #{tpu_custom_call.1} parent=35 // pred_fallthru
          _
        %p260 = scmp.lt.s32.totalorder %s28, 1
        %s261 = scalar_select %p260, %s28, 1
        %s262 = smul.addr %s261, 8
        %s263 = scalar_lea.vmem %s0, %s262
        %p264 = pneg %p57
        %p265 = pneg %p54
        %s266 = sand.u32 %s70, 1
        %s267 = scalar_lea.sflag [#allocation3], %s266
        %s268 = sand.u32 %s70, 1
        %s269 = smul.addr %s268, 128
        %s270 = scalar_lea.vmem [#allocation2], %s269
        %p271 = pneg %p83
        %p272 = pneg %p80
        %s273 = sand.u32 %s96, 1
        %s274 = scalar_lea.sflag [#allocation6], %s273
        %s275 = sand.u32 %s96, 1
        %s276 = scalar_lea.vmem [#allocation5], %s275
        %p277 = pneg %p109
        %p278 = pneg %p106
        %p279 = scmp.lt.s32.totalorder %s28, 1
        %s280 = scalar_select %p279, %s28, 1
        %s281 = smul.addr %s280, 8
        %s282 = scalar_lea.vmem %s3, %s281
        %p283 = pneg %p135
        %p284 = pneg %p132
        %p285 = pneg %p163
        %p286 = pneg %p160
        %s287 = sand.u32 %s150, 1
        %s288 = scalar_lea.sflag [#allocation4], %s287
        %s289 = sand.u32 %s150, 1
        %s290 = smul.addr %s289, 8
        %s291 = scalar_lea.vmem [#allocation7], %s290
        %p292 = scmp.lt.s32.totalorder %s28, 1
        %s293 = scalar_select %p292, %s28, 1
        %s294 = smul.addr %s293, 8
        %s295 = scalar_lea.vmem %s0, %s294
        %p296 = scmp.lt.s32.totalorder %s28, 1
        %s297 = scalar_select %p296, %s28, 1
        %s298 = smul.addr %s297, 8
        %s299 = scalar_lea.vmem %s3, %s298
        %v300 = vld [vmem:[%s295] sm:$0xff]
        %v301 = vmul.f32 %v300, %v300
        %302 = vadd.xlane.f32.xlu0 %v301
        %v303 = vpop.xlane.xlu0 %302
        %v304 = vmax.f32 %v303, 1e-24
        %v305 = vrsqrt.pop %v304
        %v306 = vmul.f32 %v305, %v304
        %v307 = vmul.f32 %v306, %v305
        %v308 = vmul.f32 0.5, %v307
        %v309 = vsub.f32 1.5, %v308
        %v310 = vmul.f32 %v305, %v309
        %vm311 = vweird.f32 %v304
        %vm312 = vweird.f32 %v305
        %vm313 = vmor %vm311, %vm312
        %v314 = vsel %vm313, %v305, %v310
        %v315 = vld [vmem:[%s254] sm:$0x1]
        %v316 = vmax.f32 %v315, 1e-24
        %v317 = vrsqrt.pop %v316
        %v318 = vmul.f32 %v317, %v316
        %v319 = vmul.f32 %v318, %v317
        %v320 = vmul.f32 0.5, %v319
        %v321 = vsub.f32 1.5, %v320
        %v322 = vmul.f32 %v317, %v321
        %vm323 = vweird.f32 %v316
        %vm324 = vweird.f32 %v317
        %vm325 = vmor %vm323, %vm324
        %v326 = vsel %vm325, %v317, %v322
        %v327 = vld [vmem:[%s245] sm:$0xff]
        %v328 = vld [vmem:[%s245 + $0x8] sm:$0xff]
        %v329 = vld [vmem:[%s245 + $0x10] sm:$0xff]
        %v330 = vld [vmem:[%s245 + $0x18] sm:$0xff]
        %v331 = vld [vmem:[%s245 + $0x20] sm:$0xff]
        %v332 = vld [vmem:[%s245 + $0x28] sm:$0xff]
        %v333 = vld [vmem:[%s245 + $0x30] sm:$0xff]
        %v334 = vld [vmem:[%s245 + $0x38] sm:$0xff]
        %v335 = vld [vmem:[%s245 + $0x40] sm:$0xff]
        %v336 = vld [vmem:[%s245 + $0x48] sm:$0xff]
        %v337 = vld [vmem:[%s245 + $0x50] sm:$0xff]
        %v338 = vld [vmem:[%s245 + $0x58] sm:$0xff]
        %v339 = vld [vmem:[%s245 + $0x60] sm:$0xff]
        %v340 = vld [vmem:[%s245 + $0x68] sm:$0xff]
        %v341 = vld [vmem:[%s245 + $0x70] sm:$0xff]
        %v342 = vld [vmem:[%s245 + $0x78] sm:$0xff]
        %343 = vmatpush.msra.mxu0 %v342
        %344 = vmatpush.msra.mxu0 %v341
        %345 = vmatpush.msra.mxu0 %v340
        %346 = vmatpush.msra.mxu0 %v339
        %347 = vmatpush.msra.mxu0 %v338
        %348 = vmatpush.msra.mxu0 %v337
        %349 = vmatpush.msra.mxu0 %v336
        %350 = vmatpush.msra.mxu0 %v335
        %351 = vmatpush.msra.mxu0 %v334
        %352 = vmatpush.msra.mxu0 %v333
        %353 = vmatpush.msra.mxu0 %v332
        %354 = vmatpush.msra.mxu0 %v331
        %355 = vmatpush.msra.mxu0 %v330
        %356 = vmatpush.msra.mxu0 %v329
        %357 = vmatpush.msra.mxu0 %v328
        %358 = vmatpush.msra.mxu0 %v327
        %359 = vmatmul.f32.gmra.mxu0 %v300
        %v360 = vpop.f32.mrf.mxu0
        %v361 = vadd.f32 0.0, %v360
        %362 = vdwg.mxu0
        %v363 = vmul.f32 %v361, %v314
        %v365 = vperm.slane %v326, 0
        %v367 = vmul.f32 %v363, %v365
        %v368 = vmax.f32 %v367, -0.99
        %v369 = vmin.f32 %v368, 0.99
        %v370 = vmul.f32 %v369, 0.87758255
        %v371 = vmul.f32 %v369, %v369
        %v372 = vsub.f32 1.0, %v371
        %v373 = vmax.f32 %v372, 0.0
        %v374 = vrsqrt.pop %v373
        %v375 = vmul.f32 %v374, %v373
        %v376 = vmul.f32 %v375, %v374
        %v377 = vmul.f32 0.5, %v376
        %v378 = vsub.f32 1.5, %v377
        %v379 = vmul.f32 %v374, %v378
        %v380 = vmul.f32 %v373, %v379
        %vm381 = vcmp.eq.f32.partialorder %v373, inf
        %v382 = vsel %vm381, %v373, %v380
        %vm383 = vcmp.eq.f32.partialorder %v373, 0.0
        %v384 = vand.u32 %v373, 2147483648
        %v385 = vsel %vm383, %v384, %v382
        %v386 = vmul.f32 %v385, 0.47942555
        %v387 = vsub.f32 %v370, %v386
        %vm388 = vcmp.gt.f32.partialorder %v369, 0.0
        %v389 = vsel %vm388, %v387, %v369
        %v390 = vlaneseq
        %v391 = vand.u32 %v390, 127
        %s392 = smul.u32 %s29, 128
        %v393 = vstv %s392
        %v394 = vadd.s32 %v391, %v393
        %v395 = vld [vmem:[%s299] sm:$0xff]
        %396 = vset.pattern.permute.xlu0 0
        %397 = vperm.xlu0 %396, %v395
        %v398 = vpop.permute.xlu0 %397
        %vm399 = vcmp.eq.s32.totalorder %v394, %v398
        %v400 = vsel %vm399, 1, 0
        %v401 = vcvt.s32.f32 %v400
        %v402 = vsub.f32 %v389, %v369
        %v403 = vmul.f32 %v401, %v402
        %v404 = vadd.f32 %v369, %v403
        %405 = vst [vmem:[%s291] sm:$0xff] %v404
        %s406 = sand.u32 %s150, 1
        %s407 = scalar_lea.sflag [#allocation4], %s406
        %s408 = sand.u32 %s150, 1
        %s409 = smul.addr %s408, 8
        %s410 = scalar_lea.vmem [#allocation7], %s409
        // Predicated region
        $region45: #{tpu_custom_call.1} parent=35 // pred_check
          %p411 = pneg %p160
        $region46: #{tpu_custom_call.1} parent=35 // pred_check_branch
          %413 = sbr.rel (%p411) target = $region48
        $region47: #{tpu_custom_call.1} parent=35 // pred_region
          %415 = vsyncadd %s407, 0
          %s416 = smul.addr %s28, 3
          %s417 = sadd.s32 %s29, %s416
          %s418 = smul.addr %s417, 8
          %s419 = scalar_lea.hbm %s4, %s418
          %s421 = sshll.u32 %s410, 4
          %s422 = int_to_ptr.vmem [resolvable:$true] %s421
          %s423 = sshll.u32 %s419, 4
          %s424 = int_to_ptr.hbm [resolvable:$true] %s423
          %426 = dma.vmem_to_hbm [thread:$0]  %s422, 128, %s424, %s407
        $region48: #{tpu_custom_call.1} parent=35 // pred_fallthru
          _
      $region36: #{tpu_custom_call.1} parent=5 // pred_fallthru
        _
      %p427 = scmp.le.s32.totalorder 2, %s19
      // Predicated region
      $region49: #{tpu_custom_call.1} parent=5 // pred_check
        %p428 = pneg %p427
      $region50: #{tpu_custom_call.1} parent=5 // pred_check_branch
        %430 = sbr.rel (%p428) target = $region52
      $region51: #{tpu_custom_call.1} parent=5 // pred_region
        %s431 = ssub.s32 %s19, 2
        // Predicated region
        $region53: #{tpu_custom_call.1} parent=51 // pred_check
          %p432 = pneg %p166
        $region54: #{tpu_custom_call.1} parent=51 // pred_check_branch
          %434 = sbr.rel (%p432) target = $region56
        $region55: #{tpu_custom_call.1} parent=51 // pred_region
          %s435 = sand.u32 %s151, 1
          %s436 = scalar_lea.sflag [#allocation4], %s435
          %s437 = sand.u32 %s151, 1
          %s438 = smul.addr %s437, 8
          %s439 = scalar_lea.vmem [#allocation7], %s438
          %441 = dma.done %s436, 128
        $region56: #{tpu_custom_call.1} parent=51 // pred_fallthru
          _
      $region52: #{tpu_custom_call.1} parent=5 // pred_fallthru
        _
    $region6: #{tpu_custom_call.1} parent=1 // loop_footer
      %s23 = sadd.s32 1, %s19
    $region7: #{tpu_custom_call.1} parent=1 // loop_footer_branch
      %18 = sbr.rel target = $region3
    $region8: #{tpu_custom_call.1} parent=1 // loop_exit
      _
    %442 = vsyncpa [#allocation3], 1
    %s443 = scalar_lea.sflag [#allocation3], 1
    %444 = vsyncpa %s443, 1
    %445 = vsyncpa [#allocation6], 1
    %s446 = scalar_lea.sflag [#allocation6], 1
    %447 = vsyncpa %s446, 1
    %448 = vsyncpa [#allocation4], 1
    %s449 = scalar_lea.sflag [#allocation4], 1
    %450 = vsyncpa %s449, 1

</llo_original>
